<compile_context>
chip_gen: v7x
topology: tpu7x:2x2x1
jax: 0.10.0
libtpu: 0.0.40
codegen_flags: <defaults>
</compile_context>

<pallas_src>
import jax
import jax.numpy as jnp
from jax.experimental import pallas as pl
from jax.experimental.pallas import tpu as pltpu

LANE = 128                 # vreg lane width
SUBL = 8                   # f32 sublanes per vreg
SUB = SUBL * LANE          # 1024 samples = one fully packed f32 vreg per feature row
IN = 4                     # fc1 in features
HID = 3                    # fc1 out features
MAX_TILE = 64 * SUB        # 65536 samples per grid step (~2.6 MiB VMEM double-buffered)


def mlp_kernel(w1_ref, b1_ref, w2_ref, b2_ref, x_ref, o_ref):
    """x_ref: (IN, R, 128) VMEM tile (R = tile//128, multiple of 8), batch packed
    densely over sublanes+lanes.  o_ref: (R, 128).  Params are flat f32 SMEM scalars:
      w1_ref: (IN*HID,) with w1_ref[k*HID + j] = W1[j, k]   ((in, out) layout)
      b1_ref: (HID,)   w2_ref: (HID,)   b2_ref: (1,)
    """
    # Hoist every SMEM scalar read once per grid step (splat once, reuse in the
    # unrolled VALU MAC chain below).
    w1 = [[w1_ref[k * HID + j] for j in range(HID)] for k in range(IN)]
    b1 = [b1_ref[j] for j in range(HID)]
    w2 = [w2_ref[j] for j in range(HID)]
    b2 = b2_ref[0]

    # Dense (R, 128) slabs — one per input feature. x_ref[k] with static k loads the
    # full 2-D slice (all 8 sublanes of every vreg occupied).
    xs = [x_ref[k] for k in range(IN)]

    y = None
    for j in range(HID):                      # fully unrolled: pure VPU mul/add
        acc = xs[0] * w1[0][j] + b1[j]
        for k in range(1, IN):
            acc = acc + xs[k] * w1[k][j]
        h = jnp.maximum(acc, 0.0)             # ReLU
        y = h * w2[j] if y is None else y + h * w2[j]
    o_ref[...] = (y + b2).astype(o_ref.dtype)


def simple_mlp(x, w1, b1, w2, b2, max_tile=MAX_TILE):
    """x: (B, 4) f32; w1: (3, 4) [PyTorch (out, in)]; b1: (3,); w2: (1, 3); b2: (1,).

    Returns (B, 1), matching SimpleMLP.forward.
    """
    B = x.shape[0]

    # --- tile / grid selection (all Python ints) -------------------------------
    n_sub = pl.cdiv(B, SUB)                        # number of 1024-sample sub-blocks
    max_tile_sub = max(1, max_tile // SUB)
    grid_steps = max(1, pl.cdiv(n_sub, max_tile_sub))
    if n_sub >= 2:
        grid_steps = max(grid_steps, 2)            # v7x: >=2 parallel steps -> 2 TCs
    if grid_steps > 2 and grid_steps % 2:
        grid_steps += 1                            # even split across the two TCs
    tile_sub = pl.cdiv(n_sub, grid_steps)
    grid_steps = pl.cdiv(n_sub, tile_sub)
    b_pad = grid_steps * tile_sub * SUB            # waste < grid_steps sub-blocks
    rows = tile_sub * SUBL                         # block sublane-rows (multiple of 8)

    # --- layout glue (wrapper-side, not in the kernel) --------------------------
    # Pad to b_pad, transpose to feature-major, then a free contiguous reshape to
    # (IN, b_pad//128, 128).  If the caller can supply x feature-major (4, B)
    # upstream, this transpose (one extra HBM pass over x) disappears entirely.
    x_pad = jnp.zeros((b_pad, IN), x.dtype).at[:B, :].set(x)
    x_t = x_pad.T.reshape(IN, b_pad // LANE, LANE)

    w1_flat = w1.T.reshape(-1)      # (in, out) row-major -> w1_flat[k*HID + j] = W1[j,k]
    b1_flat = b1.reshape(-1)
    w2_flat = w2.reshape(-1)
    b2_flat = b2.reshape(-1)

    out = pl.pallas_call(
        mlp_kernel,
        out_shape=jax.ShapeDtypeStruct((b_pad // LANE, LANE), x.dtype),
        grid=(grid_steps,),
        in_specs=[
            pl.BlockSpec(memory_space=pltpu.SMEM),            # w1 scalars
            pl.BlockSpec(memory_space=pltpu.SMEM),            # b1 scalars
            pl.BlockSpec(memory_space=pltpu.SMEM),            # w2 scalars
            pl.BlockSpec(memory_space=pltpu.SMEM),            # b2 scalar
            pl.BlockSpec((IN, rows, LANE), lambda i: (0, i, 0)),   # x tile (dense vregs)
        ],
        out_specs=pl.BlockSpec((rows, LANE), lambda i: (i, 0)),
        compiler_params=pltpu.CompilerParams(
            dimension_semantics=("parallel",)),               # megacore sharding on v7x
        cost_estimate=pl.CostEstimate(
            flops=30 * B, transcendentals=0, bytes_accessed=20 * B),
    )(w1_flat, b1_flat, w2_flat, b2_flat, x_t)

    # Padded lanes carry relu(b1)·w2+b2 garbage; slice them off before returning.
    return out.reshape(-1)[:B].reshape(B, 1)


if __name__ == "__main__":
    key = jax.random.PRNGKey(0)
    kx, k1, k2, k3, k4, kx2 = jax.random.split(key, 6)

    # PyTorch parameter shapes: fc1.weight (3,4), fc1.bias (3,),
    # fc2.weight (1,3), fc2.bias (1,).
    w1 = jax.random.normal(k1, (3, 4), dtype=jnp.float32) * 0.5
    b1 = jax.random.normal(k2, (3,), dtype=jnp.float32) * 0.1
    w2 = jax.random.normal(k3, (1, 3), dtype=jnp.float32) * 0.5
    b2 = jax.random.normal(k4, (1,), dtype=jnp.float32) * 0.1

    def ref_fn(xx):
        return jnp.maximum(xx @ w1.T + b1, 0.0) @ w2.T + b2

    # Small batch: single grid step, batch padded to one 1024-sample sub-block.
    B = 8
    x = jax.random.normal(kx, (B, 4), dtype=jnp.float32)
    out = simple_mlp(x, w1, b1, w2, b2)
    jax.block_until_ready(out)
    assert out.shape == (B, 1)
    assert jnp.allclose(out, ref_fn(x), atol=1e-5), "mismatch vs reference (B=8)"

    # Larger batch exercising >=2 pipelined/parallel grid steps + tail padding.
    B2 = 2500
    x2 = jax.random.normal(kx2, (B2, 4), dtype=jnp.float32)
    out2 = simple_mlp(x2, w1, b1, w2, b2)
    jax.block_until_ready(out2)
    assert out2.shape == (B2, 1)
    assert jnp.allclose(out2, ref_fn(x2), atol=1e-5), "mismatch vs reference (B=2500)"

    print("KERNEL_OK")
</pallas_src>

<mosaic_0001>
module attributes {stable_mosaic.version = 11 : i64} {
  func.func @mlp_kernel(%arg0: i32, %arg1: memref<12xf32, #tpu.memory_space<smem>>, %arg2: memref<3xf32, #tpu.memory_space<smem>>, %arg3: memref<3xf32, #tpu.memory_space<smem>>, %arg4: memref<1xf32, #tpu.memory_space<smem>>, %arg5: memref<4x8x128xf32, #tpu.memory_space<vmem>>, %arg6: memref<8x128xf32, #tpu.memory_space<vmem>>) attributes {dimension_semantics = [#tpu.dimension_semantics<parallel>], iteration_bounds = array<i64: 1>, scalar_prefetch = 0 : i64, scratch_operands = 0 : i64, tpu.core_type = #tpu.core_type<tc>, window_params = [{transform_indices = @transform_0, window_bounds = array<i64: 12>}, {transform_indices = @transform_1, window_bounds = array<i64: 3>}, {transform_indices = @transform_2, window_bounds = array<i64: 3>}, {transform_indices = @transform_3, window_bounds = array<i64: 1>}, {transform_indices = @transform_4, window_bounds = array<i64: 4, 8, 128>}, {transform_indices = @transform_5, window_bounds = array<i64: 8, 128>}]} {
    %c0 = arith.constant 0 : index
    %0 = memref.load %arg1[%c0] : memref<12xf32, #tpu.memory_space<smem>>
    %c1 = arith.constant 1 : index
    %1 = memref.load %arg1[%c1] : memref<12xf32, #tpu.memory_space<smem>>
    %c2 = arith.constant 2 : index
    %2 = memref.load %arg1[%c2] : memref<12xf32, #tpu.memory_space<smem>>
    %c3 = arith.constant 3 : index
    %3 = memref.load %arg1[%c3] : memref<12xf32, #tpu.memory_space<smem>>
    %c4 = arith.constant 4 : index
    %4 = memref.load %arg1[%c4] : memref<12xf32, #tpu.memory_space<smem>>
    %c5 = arith.constant 5 : index
    %5 = memref.load %arg1[%c5] : memref<12xf32, #tpu.memory_space<smem>>
    %c6 = arith.constant 6 : index
    %6 = memref.load %arg1[%c6] : memref<12xf32, #tpu.memory_space<smem>>
    %c7 = arith.constant 7 : index
    %7 = memref.load %arg1[%c7] : memref<12xf32, #tpu.memory_space<smem>>
    %c8 = arith.constant 8 : index
    %8 = memref.load %arg1[%c8] : memref<12xf32, #tpu.memory_space<smem>>
    %c9 = arith.constant 9 : index
    %9 = memref.load %arg1[%c9] : memref<12xf32, #tpu.memory_space<smem>>
    %c10 = arith.constant 10 : index
    %10 = memref.load %arg1[%c10] : memref<12xf32, #tpu.memory_space<smem>>
    %c11 = arith.constant 11 : index
    %11 = memref.load %arg1[%c11] : memref<12xf32, #tpu.memory_space<smem>>
    %c0_0 = arith.constant 0 : index
    %12 = memref.load %arg2[%c0_0] : memref<3xf32, #tpu.memory_space<smem>>
    %c1_1 = arith.constant 1 : index
    %13 = memref.load %arg2[%c1_1] : memref<3xf32, #tpu.memory_space<smem>>
    %c2_2 = arith.constant 2 : index
    %14 = memref.load %arg2[%c2_2] : memref<3xf32, #tpu.memory_space<smem>>
    %c0_3 = arith.constant 0 : index
    %15 = memref.load %arg3[%c0_3] : memref<3xf32, #tpu.memory_space<smem>>
    %c1_4 = arith.constant 1 : index
    %16 = memref.load %arg3[%c1_4] : memref<3xf32, #tpu.memory_space<smem>>
    %c2_5 = arith.constant 2 : index
    %17 = memref.load %arg3[%c2_5] : memref<3xf32, #tpu.memory_space<smem>>
    %c0_6 = arith.constant 0 : index
    %18 = memref.load %arg4[%c0_6] : memref<1xf32, #tpu.memory_space<smem>>
    %c0_7 = arith.constant 0 : index
    %c0_8 = arith.constant 0 : index
    %c0_9 = arith.constant 0 : index
    %19 = vector.load %arg5[%c0_7, %c0_8, %c0_9] : memref<4x8x128xf32, #tpu.memory_space<vmem>>, vector<1x8x128xf32>
    %20 = vector.shape_cast %19 : vector<1x8x128xf32> to vector<8x128xf32>
    %c1_10 = arith.constant 1 : index
    %c0_11 = arith.constant 0 : index
    %c0_12 = arith.constant 0 : index
    %21 = vector.load %arg5[%c1_10, %c0_11, %c0_12] : memref<4x8x128xf32, #tpu.memory_space<vmem>>, vector<1x8x128xf32>
    %22 = vector.shape_cast %21 : vector<1x8x128xf32> to vector<8x128xf32>
    %c2_13 = arith.constant 2 : index
    %c0_14 = arith.constant 0 : index
    %c0_15 = arith.constant 0 : index
    %23 = vector.load %arg5[%c2_13, %c0_14, %c0_15] : memref<4x8x128xf32, #tpu.memory_space<vmem>>, vector<1x8x128xf32>
    %24 = vector.shape_cast %23 : vector<1x8x128xf32> to vector<8x128xf32>
    %c3_16 = arith.constant 3 : index
    %c0_17 = arith.constant 0 : index
    %c0_18 = arith.constant 0 : index
    %25 = vector.load %arg5[%c3_16, %c0_17, %c0_18] : memref<4x8x128xf32, #tpu.memory_space<vmem>>, vector<1x8x128xf32>
    %26 = vector.shape_cast %25 : vector<1x8x128xf32> to vector<8x128xf32>
    %27 = vector.broadcast %0 : f32 to vector<8x128xf32>
    %28 = arith.mulf %20, %27 : vector<8x128xf32>
    %29 = vector.broadcast %12 : f32 to vector<8x128xf32>
    %30 = arith.addf %28, %29 : vector<8x128xf32>
    %31 = vector.broadcast %3 : f32 to vector<8x128xf32>
    %32 = arith.mulf %22, %31 : vector<8x128xf32>
    %33 = arith.addf %30, %32 : vector<8x128xf32>
    %34 = vector.broadcast %6 : f32 to vector<8x128xf32>
    %35 = arith.mulf %24, %34 : vector<8x128xf32>
    %36 = arith.addf %33, %35 : vector<8x128xf32>
    %37 = vector.broadcast %9 : f32 to vector<8x128xf32>
    %38 = arith.mulf %26, %37 : vector<8x128xf32>
    %39 = arith.addf %36, %38 : vector<8x128xf32>
    %cst = arith.constant 0.000000e+00 : f32
    %40 = vector.broadcast %cst : f32 to vector<8x128xf32>
    %41 = arith.maximumf %39, %40 : vector<8x128xf32>
    %42 = vector.broadcast %15 : f32 to vector<8x128xf32>
    %43 = arith.mulf %41, %42 : vector<8x128xf32>
    %44 = vector.broadcast %1 : f32 to vector<8x128xf32>
    %45 = arith.mulf %20, %44 : vector<8x128xf32>
    %46 = vector.broadcast %13 : f32 to vector<8x128xf32>
    %47 = arith.addf %45, %46 : vector<8x128xf32>
    %48 = vector.broadcast %4 : f32 to vector<8x128xf32>
    %49 = arith.mulf %22, %48 : vector<8x128xf32>
    %50 = arith.addf %47, %49 : vector<8x128xf32>
    %51 = vector.broadcast %7 : f32 to vector<8x128xf32>
    %52 = arith.mulf %24, %51 : vector<8x128xf32>
    %53 = arith.addf %50, %52 : vector<8x128xf32>
    %54 = vector.broadcast %10 : f32 to vector<8x128xf32>
    %55 = arith.mulf %26, %54 : vector<8x128xf32>
    %56 = arith.addf %53, %55 : vector<8x128xf32>
    %cst_19 = arith.constant 0.000000e+00 : f32
    %57 = vector.broadcast %cst_19 : f32 to vector<8x128xf32>
    %58 = arith.maximumf %56, %57 : vector<8x128xf32>
    %59 = vector.broadcast %16 : f32 to vector<8x128xf32>
    %60 = arith.mulf %58, %59 : vector<8x128xf32>
    %61 = arith.addf %43, %60 : vector<8x128xf32>
    %62 = vector.broadcast %2 : f32 to vector<8x128xf32>
    %63 = arith.mulf %20, %62 : vector<8x128xf32>
    %64 = vector.broadcast %14 : f32 to vector<8x128xf32>
    %65 = arith.addf %63, %64 : vector<8x128xf32>
    %66 = vector.broadcast %5 : f32 to vector<8x128xf32>
    %67 = arith.mulf %22, %66 : vector<8x128xf32>
    %68 = arith.addf %65, %67 : vector<8x128xf32>
    %69 = vector.broadcast %8 : f32 to vector<8x128xf32>
    %70 = arith.mulf %24, %69 : vector<8x128xf32>
    %71 = arith.addf %68, %70 : vector<8x128xf32>
    %72 = vector.broadcast %11 : f32 to vector<8x128xf32>
    %73 = arith.mulf %26, %72 : vector<8x128xf32>
    %74 = arith.addf %71, %73 : vector<8x128xf32>
    %cst_20 = arith.constant 0.000000e+00 : f32
    %75 = vector.broadcast %cst_20 : f32 to vector<8x128xf32>
    %76 = arith.maximumf %74, %75 : vector<8x128xf32>
    %77 = vector.broadcast %17 : f32 to vector<8x128xf32>
    %78 = arith.mulf %76, %77 : vector<8x128xf32>
    %79 = arith.addf %61, %78 : vector<8x128xf32>
    %80 = vector.broadcast %18 : f32 to vector<8x128xf32>
    %81 = arith.addf %79, %80 : vector<8x128xf32>
    %c0_21 = arith.constant 0 : index
    %c0_22 = arith.constant 0 : index
    %82 = vector.load %arg6[%c0_21, %c0_22] : memref<8x128xf32, #tpu.memory_space<vmem>>, vector<8x128xf32>
    tpu.vector_store %arg6[%c0_21, %c0_22], %81 {strides = array<i32>} : memref<8x128xf32, #tpu.memory_space<vmem>>, vector<8x128xf32>,
    return
  }
  func.func @transform_0(%arg0: i32) -> i32 {
    %c0_i32 = arith.constant 0 : i32
    %c0_i32_0 = arith.constant 0 : i32
    return %c0_i32 : i32
  }
  func.func @transform_1(%arg0: i32) -> i32 {
    %c0_i32 = arith.constant 0 : i32
    %c0_i32_0 = arith.constant 0 : i32
    return %c0_i32 : i32
  }
  func.func @transform_2(%arg0: i32) -> i32 {
    %c0_i32 = arith.constant 0 : i32
    %c0_i32_0 = arith.constant 0 : i32
    return %c0_i32 : i32
  }
  func.func @transform_3(%arg0: i32) -> i32 {
    %c0_i32 = arith.constant 0 : i32
    %c0_i32_0 = arith.constant 0 : i32
    return %c0_i32 : i32
  }
  func.func @transform_4(%arg0: i32) -> (i32, i32, i32) {
    %c0_i32 = arith.constant 0 : i32
    %c0_i32_0 = arith.constant 0 : i32
    %c0_i32_1 = arith.constant 0 : i32
    return %c0_i32, %arg0, %c0_i32_0 : i32, i32, i32
  }
  func.func @transform_5(%arg0: i32) -> (i32, i32) {
    %c0_i32 = arith.constant 0 : i32
    %c0_i32_0 = arith.constant 0 : i32
    return %arg0, %c0_i32 : i32, i32
  }
}

</mosaic_0001>

<llo_original>
// kernel: tpu_custom_call.1
$region0: #{tpu_custom_call.1}
  #allocation0 [shape = 'u32[]', space=smem, size = 0x4, offset = 0x4, fixed_abs, tag = 'smem constant byte address 0x4 - core index']
  #allocation1 [shape = 'u32[144,128]{1,0:T(1,128)}', space=vmem, size = 0x12000, scoped, tag = 'internal scratch']
  #allocation2 [shape = 'f32[1]{0:T(128)S(6)}', space=smem, size = 0x200, scoped, tag = 'scoped memory for tpu_custom_call.1']
  %s0 = inlined_call_operand.vmem [shape: f32[12], index: 0, kind: input, shape index: {}]
  %s1 = inlined_call_operand.vmem [shape: f32[3], index: 1, kind: input, shape index: {}]
  %s2 = inlined_call_operand.vmem [shape: f32[3], index: 2, kind: input, shape index: {}]
  %s3 = inlined_call_operand.<no memory space> [shape: f32[1], index: 3, kind: input, shape index: {}]
  %s4 = inlined_call_operand.hbm [shape: f32[4,8,128], index: 4, kind: input, shape index: {}]
  %s5 = inlined_call_operand.hbm [shape: f32[8,128], index: 5, kind: output, shape index: {}]
  %s6 = sld [smem:[#allocation0]]
  $region46: #{tpu_custom_call.1} parent=0
    _
  %s8 = ssub.s32 1, %s6
  %s9 = scalar_select 0, %s8, %s6
  %10 = sst [smem:[#allocation2]] %s3
  $region1: #{tpu_custom_call.1} parent=0
    #allocation3 [shape = 'u8[512]{0}', space=smem, size = 0x200, scoped, tag = 'input window, operand 0, single buffered']
    #allocation4 [shape = 's32[1]{0}', space=sflag, size = 0x4, scoped, tag = 'scoped memory for tpu_custom_call.1']
    #allocation5 [shape = 's32[1]{0}', space=sflag, size = 0x4, scoped, tag = 'scoped memory for tpu_custom_call.1']
    #allocation6 [shape = 's32[1]{0}', space=sflag, size = 0x4, scoped, tag = 'scoped memory for tpu_custom_call.1']
    #allocation7 [shape = 'u8[512]{0}', space=smem, size = 0x200, scoped, tag = 'input window, operand 1, single buffered']
    #allocation8 [shape = 's32[1]{0}', space=sflag, size = 0x4, scoped, tag = 'scoped memory for tpu_custom_call.1']
    #allocation9 [shape = 'u8[512]{0}', space=smem, size = 0x200, scoped, tag = 'input window, operand 2, single buffered']
    #allocation10 [shape = 'u8[16384]{0}', space=vmem, size = 0x4000, scoped, tag = 'input window, operand 4, single buffered']
    #allocation11 [shape = 'u8[4096]{0}', space=vmem, size = 0x1000, scoped, tag = 'output window, operand 0, single buffered']
    %11 = vsyncpa [#allocation6], 0
    %12 = vsyncpa [#allocation8], 0
    %13 = vsyncpa [#allocation4], 0
    %14 = vsyncpa [#allocation5], 0
    // Predicated region
    $region2: #{tpu_custom_call.1} parent=1 // pred_check
      _
    $region3: #{tpu_custom_call.1} parent=1 // pred_check_branch
      %16 = sbr.rel (0) target = $region5
    $region4: #{tpu_custom_call.1} parent=1 // pred_region
      %s18 = ssub.s32 16, 16
      %19 = vsyncadd [#allocation6], %s18
      %s21 = sshll.u32 %s0, 4
      %s22 = int_to_ptr.vmem [resolvable:$true] %s21
      %24 = dma.vmem_to_smem %s22, 16, [#allocation3], [#allocation6]
    $region5: #{tpu_custom_call.1} parent=1 // pred_fallthru
      _
    // Predicated region
    $region6: #{tpu_custom_call.1} parent=1 // pred_check
      _
    $region7: #{tpu_custom_call.1} parent=1 // pred_check_branch
      %26 = sbr.rel (0) target = $region9
    $region8: #{tpu_custom_call.1} parent=1 // pred_region
      %s28 = ssub.s32 16, 16
      %29 = vsyncadd [#allocation8], %s28
      %s31 = sshll.u32 %s1, 4
      %s32 = int_to_ptr.vmem [resolvable:$true] %s31
      %34 = dma.vmem_to_smem %s32, 16, [#allocation7], [#allocation8]
    $region9: #{tpu_custom_call.1} parent=1 // pred_fallthru
      _
    // Predicated region
    $region10: #{tpu_custom_call.1} parent=1 // pred_check
      _
    $region11: #{tpu_custom_call.1} parent=1 // pred_check_branch
      %36 = sbr.rel (0) target = $region13
    $region12: #{tpu_custom_call.1} parent=1 // pred_region
      %s38 = ssub.s32 16, 16
      %39 = vsyncadd [#allocation8], %s38
      %s41 = sshll.u32 %s2, 4
      %s42 = int_to_ptr.vmem [resolvable:$true] %s41
      %44 = dma.vmem_to_smem %s42, 16, [#allocation9], [#allocation8]
    $region13: #{tpu_custom_call.1} parent=1 // pred_fallthru
      _
    // Predicated region
    $region14: #{tpu_custom_call.1} parent=1 // pred_check
      _
    $region15: #{tpu_custom_call.1} parent=1 // pred_check_branch
      %46 = sbr.rel (0) target = $region17
    $region16: #{tpu_custom_call.1} parent=1 // pred_region
      _
    $region17: #{tpu_custom_call.1} parent=1 // pred_fallthru
      _
    // Predicated region
    $region18: #{tpu_custom_call.1} parent=1 // pred_check
      _
    $region19: #{tpu_custom_call.1} parent=1 // pred_check_branch
      %48 = sbr.rel (0) target = $region21
    $region20: #{tpu_custom_call.1} parent=1 // pred_region
      %s50 = ssub.s32 512, 512
      %51 = vsyncadd [#allocation4], %s50
      %s52 = sshll.u32 [#allocation10], 4
      %s53 = int_to_ptr.vmem [resolvable:$true] %s52
      %58 = dma.hbm_to_vmem [thread:$0]  %s4, 512, %s53, [#allocation4], 128, 128, 8
    $region21: #{tpu_custom_call.1} parent=1 // pred_fallthru
      _
    // Predicated region
    $region22: #{tpu_custom_call.1} parent=1 // pred_check
      _
    $region23: #{tpu_custom_call.1} parent=1 // pred_check_branch
      %60 = sbr.rel (0) target = $region25
    $region24: #{tpu_custom_call.1} parent=1 // pred_region
      %61 = dma.done [#allocation6], 16
    $region25: #{tpu_custom_call.1} parent=1 // pred_fallthru
      _
    // Predicated region
    $region26: #{tpu_custom_call.1} parent=1 // pred_check
      _
    $region27: #{tpu_custom_call.1} parent=1 // pred_check_branch
      %63 = sbr.rel (0) target = $region29
    $region28: #{tpu_custom_call.1} parent=1 // pred_region
      %64 = dma.done [#allocation8], 16
    $region29: #{tpu_custom_call.1} parent=1 // pred_fallthru
      _
    // Predicated region
    $region30: #{tpu_custom_call.1} parent=1 // pred_check
      _
    $region31: #{tpu_custom_call.1} parent=1 // pred_check_branch
      %66 = sbr.rel (0) target = $region33
    $region32: #{tpu_custom_call.1} parent=1 // pred_region
      %67 = dma.done [#allocation8], 16
    $region33: #{tpu_custom_call.1} parent=1 // pred_fallthru
      _
    // Predicated region
    $region34: #{tpu_custom_call.1} parent=1 // pred_check
      _
    $region35: #{tpu_custom_call.1} parent=1 // pred_check_branch
      %69 = sbr.rel (0) target = $region37
    $region36: #{tpu_custom_call.1} parent=1 // pred_region
      %70 = dma.done [#allocation4], 512
    $region37: #{tpu_custom_call.1} parent=1 // pred_fallthru
      _
    %71 = sfence
    %s72 = sld [smem:[#allocation3]]
    %s73 = sld [smem:[#allocation3 + $0x1]]
    %s74 = sld [smem:[#allocation3 + $0x2]]
    %s75 = sld [smem:[#allocation3 + $0x3]]
    %s76 = sld [smem:[#allocation3 + $0x4]]
    %s77 = sld [smem:[#allocation3 + $0x5]]
    %s78 = sld [smem:[#allocation3 + $0x6]]
    %s79 = sld [smem:[#allocation3 + $0x7]]
    %s80 = sld [smem:[#allocation3 + $0x8]]
    %s81 = sld [smem:[#allocation3 + $0x9]]
    %s82 = sld [smem:[#allocation3 + $0xa]]
    %s83 = sld [smem:[#allocation3 + $0xb]]
    %s84 = sld [smem:[#allocation7]]
    %s85 = sld [smem:[#allocation7 + $0x1]]
    %s86 = sld [smem:[#allocation7 + $0x2]]
    %s87 = sld [smem:[#allocation9]]
    %s88 = sld [smem:[#allocation9 + $0x1]]
    %s89 = sld [smem:[#allocation9 + $0x2]]
    %s90 = sld [smem:[#allocation2]]
    %v91 = vld [vmem:[#allocation10] sm:$0xff]
    %s92 = scalar_lea.vmem [#allocation10], 8
    %v93 = vld [vmem:[%s92] sm:$0xff]
    %s94 = scalar_lea.vmem [#allocation10], 16
    %v95 = vld [vmem:[%s94] sm:$0xff]
    %s96 = scalar_lea.vmem [#allocation10], 24
    %v97 = vld [vmem:[%s96] sm:$0xff]
    %v98 = vstv %s72
    %v99 = vmul.f32 %v91, %v98
    %v100 = vstv %s84
    %v101 = vadd.f32 %v99, %v100
    %v102 = vstv %s75
    %v103 = vmul.f32 %v93, %v102
    %v104 = vadd.f32 %v101, %v103
    %v105 = vstv %s78
    %v106 = vmul.f32 %v95, %v105
    %v107 = vadd.f32 %v104, %v106
    %v108 = vstv %s81
    %v109 = vmul.f32 %v97, %v108
    %v110 = vadd.f32 %v107, %v109
    %v111 = vmax.f32 %v110, 0.0
    %v112 = vstv %s87
    %v113 = vmul.f32 %v111, %v112
    %v114 = vstv %s73
    %v115 = vmul.f32 %v91, %v114
    %v116 = vstv %s85
    %v117 = vadd.f32 %v115, %v116
    %v118 = vstv %s76
    %v119 = vmul.f32 %v93, %v118
    %v120 = vadd.f32 %v117, %v119
    %v121 = vstv %s79
    %v122 = vmul.f32 %v95, %v121
    %v123 = vadd.f32 %v120, %v122
    %v124 = vstv %s82
    %v125 = vmul.f32 %v97, %v124
    %v126 = vadd.f32 %v123, %v125
    %v127 = vmax.f32 %v126, 0.0
    %v128 = vstv %s88
    %v129 = vmul.f32 %v127, %v128
    %v130 = vadd.f32 %v113, %v129
    %v131 = vstv %s74
    %v132 = vmul.f32 %v91, %v131
    %v133 = vstv %s86
    %v134 = vadd.f32 %v132, %v133
    %v135 = vstv %s77
    %v136 = vmul.f32 %v93, %v135
    %v137 = vadd.f32 %v134, %v136
    %v138 = vstv %s80
    %v139 = vmul.f32 %v95, %v138
    %v140 = vadd.f32 %v137, %v139
    %v141 = vstv %s83
    %v142 = vmul.f32 %v97, %v141
    %v143 = vadd.f32 %v140, %v142
    %v144 = vmax.f32 %v143, 0.0
    %v145 = vstv %s89
    %v146 = vmul.f32 %v144, %v145
    %v147 = vadd.f32 %v130, %v146
    %v148 = vstv %s90
    %v149 = vadd.f32 %v147, %v148
    %150 = vst [vmem:[#allocation11] sm:$0xff] %v149
    // Predicated region
    $region38: #{tpu_custom_call.1} parent=1 // pred_check
      _
    $region39: #{tpu_custom_call.1} parent=1 // pred_check_branch
      %152 = sbr.rel (0) target = $region41
    $region40: #{tpu_custom_call.1} parent=1 // pred_region
      %s154 = ssub.s32 128, 128
      %155 = vsyncadd [#allocation5], %s154
      %s157 = sshll.u32 [#allocation11], 4
      %s158 = int_to_ptr.vmem [resolvable:$true] %s157
      %160 = dma.vmem_to_hbm [thread:$0]  %s158, 128, %s5, [#allocation5]
    $region41: #{tpu_custom_call.1} parent=1 // pred_fallthru
      _
    // Predicated region
    $region42: #{tpu_custom_call.1} parent=1 // pred_check
      _
    $region43: #{tpu_custom_call.1} parent=1 // pred_check_branch
      %162 = sbr.rel (0) target = $region45
    $region44: #{tpu_custom_call.1} parent=1 // pred_region
      %163 = dma.done [#allocation5], 128
    $region45: #{tpu_custom_call.1} parent=1 // pred_fallthru
      _
    %164 = vsyncpa [#allocation4], 1
    %165 = vsyncpa [#allocation5], 1
    %166 = vsyncpa [#allocation6], 1
    %167 = vsyncpa [#allocation8], 1

</llo_original>
